<compile_context>
chip_gen: v6e
topology: v6e:2x2x1
jax: 0.10.0
libtpu: 0.0.40
codegen_flags: <defaults>
</compile_context>

<pallas_src>
import jax
import jax.numpy as jnp
from jax.experimental import pallas as pl
from jax.experimental.pallas import tpu as pltpu

EPS = 1e-5  # torch.nn.InstanceNorm2d default (affine=False, biased variance).


def _conv3x3_lane(x, w_ref):
    """3x3 'same' conv in the lane-dense layout.

    x      : (Nb, H, W*Cin) f32 value.
    w_ref  : (3, W*Cin, W*Cout) VMEM ref of per-kh block-banded weights
             (kw taps and W zero-padding are folded into the band).
    returns: (Nb, H, W*Cout) f32.
    """
    Nb, H, K = x.shape
    WCout = w_ref.shape[-1]
    zrow = jnp.zeros((Nb, 1, K), x.dtype)
    # kh shifts = sublane slices (+ one zero row): row h of x_up holds x[h-1],
    # row h of x_dn holds x[h+1]; the zero rows implement the H padding.
    x_up = jnp.concatenate([zrow, x[:, :H - 1, :]], axis=1)
    x_dn = jnp.concatenate([x[:, 1:, :], zrow], axis=1)

    def mm(a, kh):
        return jnp.dot(a.reshape(Nb * H, K), w_ref[kh],
                       preferred_element_type=jnp.float32)

    acc = mm(x_up, 0) + mm(x, 1) + mm(x_dn, 2)
    return acc.reshape(Nb, H, WCout)


def _inorm_relu(act, pool_ref):
    """Per-image, per-channel InstanceNorm (biased var, two-pass) + ReLU.

    act      : (Nb, H, W*Cout) f32.
    pool_ref : (W*Cout, W*Cout) VMEM ref; pool[w*C+c, w'*C+o] = [c==o]/(H*W),
               so `row_sums @ pool` is the per-channel mean already broadcast
               back onto the lane-dense layout (no cross-lane shuffles).
    """
    s = jnp.sum(act, axis=1)                                    # (Nb, W*Cout)
    mean_b = jnp.dot(s, pool_ref[...], preferred_element_type=jnp.float32)
    centered = act - mean_b[:, None, :]
    sq = jnp.sum(centered * centered, axis=1)                   # (Nb, W*Cout)
    var_b = jnp.dot(sq, pool_ref[...], preferred_element_type=jnp.float32)
    return jnp.maximum(centered * jax.lax.rsqrt(var_b + EPS)[:, None, :], 0.0)


def _double_conv_kernel(x_ref, w1_ref, w2_ref, pool_ref, out_ref):
    # x_ref   : (Nb, H, W*Cin)        lane-dense input slab (Nb images)
    # w1_ref  : (3, W*Cin,  W*Cout)   banded conv1 weights (one per kh)
    # w2_ref  : (3, W*Cout, W*Cout)   banded conv2 weights
    # pool_ref: (W*Cout, W*Cout)      per-channel mean-pool matrix
    # out_ref : (Nb, H, W*Cout)       lane-dense output slab
    x = x_ref[...]
    y = _inorm_relu(_conv3x3_lane(x, w1_ref), pool_ref)
    z = _inorm_relu(_conv3x3_lane(y, w2_ref), pool_ref)
    out_ref[...] = z.astype(out_ref.dtype)


def _banded_weights(w, W):
    """(Cout, Cin, 3, 3) OIHW conv weight -> (3, W*Cin, W*Cout) banded matrices.

    B_kh[w_in*Cin + c, w_out*Cout + o] = w[o, c, kh, w_in - w_out + 1]
    (zero outside the 3-wide band), so `x_row @ B_kh` applies the kw taps and
    the W zero-padding of a 'same' 3x3 conv in one lane-dense matmul.
    """
    Cout, Cin = w.shape[0], w.shape[1]
    w_in = jnp.arange(W)[:, None]
    w_out = jnp.arange(W)[None, :]
    kw = w_in - w_out + 1                                       # (W, W)
    valid = (kw >= 0) & (kw <= 2)
    kw_c = jnp.clip(kw, 0, 2)
    mats = []
    for kh in range(3):
        tap = jnp.transpose(w[:, :, kh, :], (1, 2, 0))          # (Cin, 3, Cout)
        blk = tap[:, kw_c, :]                                   # (Cin, W, W, Cout)
        blk = jnp.where(valid[None, :, :, None], blk, 0.0)
        blk = jnp.transpose(blk, (1, 0, 2, 3)).reshape(W * Cin, W * Cout)
        mats.append(blk)
    return jnp.stack(mats, axis=0)


@jax.jit
def double_conv(x_nchw, w1, b1, w2, b2):
    """x: (N, Cin, H, W); w1: (Cout, Cin, 3, 3); w2: (Cout, Cout, 3, 3).

    b1/b2 are accepted for parity with nn.Conv2d(bias=True) but not used:
    InstanceNorm2d(affine=False) right after each conv cancels a per-channel
    bias exactly, so dropping them does not change the output.
    """
    del b1, b2
    N, Cin, H, W = x_nchw.shape
    Cout = w1.shape[0]

    # Lane-dense input: NCHW -> NHWC -> (N, H, W*Cin)  (last dim on lanes).
    x_lane = (jnp.transpose(x_nchw, (0, 2, 3, 1))
              .reshape(N, H, W * Cin).astype(jnp.float32))

    w1_b = _banded_weights(w1.astype(jnp.float32), W)   # (3, W*Cin,  W*Cout)
    w2_b = _banded_weights(w2.astype(jnp.float32), W)   # (3, W*Cout, W*Cout)
    pool = jnp.tile(jnp.eye(Cout, dtype=jnp.float32), (W, W)) / (H * W)

    # Fold the batch into the matmul M dim; keep the parallel grid a multiple
    # of 2 when possible so both v7x TensorCores get work (no-op on v5e/v6e).
    if N % 2 == 0:
        nb, steps = N // 2, 2
    else:
        nb, steps = N, 1
    # Note: for very large H*W (v7x: 64 MiB VMEM) add a spatial-row grid axis
    # with accumulated instance-norm stats; unnecessary at these shapes.

    out_lane = pl.pallas_call(
        _double_conv_kernel,
        out_shape=jax.ShapeDtypeStruct((N, H, W * Cout), jnp.float32),
        grid_spec=pltpu.PrefetchScalarGridSpec(
            num_scalar_prefetch=0,
            grid=(steps,),
            in_specs=[
                pl.BlockSpec((nb, H, W * Cin), lambda b: (b, 0, 0)),
                pl.BlockSpec((3, W * Cin, W * Cout), lambda b: (0, 0, 0)),
                pl.BlockSpec((3, W * Cout, W * Cout), lambda b: (0, 0, 0)),
                pl.BlockSpec((W * Cout, W * Cout), lambda b: (0, 0)),
            ],
            out_specs=pl.BlockSpec((nb, H, W * Cout), lambda b: (b, 0, 0)),
        ),
        compiler_params=pltpu.CompilerParams(
            dimension_semantics=("parallel",),
            # Tiny footprint at these shapes; raise toward 64-96 MiB on
            # v5e/v6e (keep <=~48 MiB on v7x) if nb / spatial tiles grow.
            vmem_limit_bytes=32 * 1024 * 1024,
        ),
    )(x_lane, w1_b, w2_b, pool)

    # (N, H, W*Cout) -> (N, H, W, Cout) -> NCHW to match PyTorch convention.
    return jnp.transpose(out_lane.reshape(N, H, W, Cout), (0, 3, 1, 2))


def _reference(x_nchw, w1, b1, w2, b2):
    """Pure-JAX reference (NCHW conv + bias + instance norm + relu, twice)."""
    def conv(x, w, b):
        y = jax.lax.conv_general_dilated(
            x, w, window_strides=(1, 1), padding="SAME",
            dimension_numbers=("NCHW", "OIHW", "NCHW"),
            precision=jax.lax.Precision.HIGHEST)
        return y + b.reshape(1, -1, 1, 1)

    def inorm_relu(y):
        m = jnp.mean(y, axis=(2, 3), keepdims=True)
        v = jnp.mean((y - m) ** 2, axis=(2, 3), keepdims=True)
        return jnp.maximum((y - m) * jax.lax.rsqrt(v + EPS), 0.0)

    y = inorm_relu(conv(x_nchw, w1, b1))
    return inorm_relu(conv(y, w2, b2))


if __name__ == "__main__":
    key = jax.random.PRNGKey(0)
    k_x, k_w1, k_b1, k_w2, k_b2 = jax.random.split(key, 5)

    N, Cin, Cout, H, W = 2, 4, 8, 16, 16

    x = jax.random.normal(k_x, (N, Cin, H, W), dtype=jnp.float32)
    # PyTorch Conv2d weight layout OIHW; biases present in the module but
    # mathematically cancelled by the following InstanceNorm.
    w1 = 0.1 * jax.random.normal(k_w1, (Cout, Cin, 3, 3), dtype=jnp.float32)
    b1 = 0.1 * jax.random.normal(k_b1, (Cout,), dtype=jnp.float32)
    w2 = 0.1 * jax.random.normal(k_w2, (Cout, Cout, 3, 3), dtype=jnp.float32)
    b2 = 0.1 * jax.random.normal(k_b2, (Cout,), dtype=jnp.float32)

    out = jax.block_until_ready(double_conv(x, w1, b1, w2, b2))

    ref = _reference(x, w1, b1, w2, b2)
    assert out.shape == (N, Cout, H, W), out.shape
    max_err = float(jnp.max(jnp.abs(out - ref)))
    assert jnp.allclose(out, ref, atol=1e-4, rtol=1e-4), max_err

    print("KERNEL_OK")
</pallas_src>

<mosaic_0001>
module attributes {stable_mosaic.version = 11 : i64} {
  func.func @_double_conv_kernel(%arg0: i32, %arg1: memref<1x16x64xf32, #tpu.memory_space<vmem>>, %arg2: memref<3x64x128xf32, #tpu.memory_space<vmem>>, %arg3: memref<3x128x128xf32, #tpu.memory_space<vmem>>, %arg4: memref<128x128xf32, #tpu.memory_space<vmem>>, %arg5: memref<1x16x128xf32, #tpu.memory_space<vmem>>) attributes {dimension_semantics = [#tpu.dimension_semantics<parallel>], iteration_bounds = array<i64: 2>, scalar_prefetch = 0 : i64, scratch_operands = 0 : i64, tpu.core_type = #tpu.core_type<tc>, window_params = [{transform_indices = @transform_0, window_bounds = array<i64: 1, 16, 64>}, {pipeline_mode = #tpu.pipeline_mode<synchronous>, transform_indices = @transform_1, window_bounds = array<i64: 3, 64, 128>}, {pipeline_mode = #tpu.pipeline_mode<synchronous>, transform_indices = @transform_2, window_bounds = array<i64: 3, 128, 128>}, {pipeline_mode = #tpu.pipeline_mode<synchronous>, transform_indices = @transform_3, window_bounds = array<i64: 128, 128>}, {transform_indices = @transform_4, window_bounds = array<i64: 1, 16, 128>}]} {
    %c0 = arith.constant 0 : index
    %c0_0 = arith.constant 0 : index
    %c0_1 = arith.constant 0 : index
    %0 = vector.load %arg1[%c0, %c0_0, %c0_1] : memref<1x16x64xf32, #tpu.memory_space<vmem>>, vector<1x16x64xf32>
    %cst = arith.constant 0.000000e+00 : f32
    %1 = vector.broadcast %cst : f32 to vector<1x1x64xf32>
    %2 = vector.extract_strided_slice %0 {offsets = [0, 0, 0], sizes = [1, 15, 64], strides = [1, 1, 1]} : vector<1x16x64xf32> to vector<1x15x64xf32>
    %3 = tpu.concatenate %1, %2 in 1 : vector<1x1x64xf32>, vector<1x15x64xf32> -> vector<1x16x64xf32>
    %4 = vector.extract_strided_slice %0 {offsets = [0, 1, 0], sizes = [1, 15, 64], strides = [1, 1, 1]} : vector<1x16x64xf32> to vector<1x15x64xf32>
    %5 = tpu.concatenate %4, %1 in 1 : vector<1x15x64xf32>, vector<1x1x64xf32> -> vector<1x16x64xf32>
    %6 = vector.shape_cast %3 : vector<1x16x64xf32> to vector<16x64xf32>
    %c0_2 = arith.constant 0 : index
    %c0_3 = arith.constant 0 : index
    %c0_4 = arith.constant 0 : index
    %7 = vector.load %arg2[%c0_2, %c0_3, %c0_4] : memref<3x64x128xf32, #tpu.memory_space<vmem>>, vector<1x64x128xf32>
    %8 = vector.shape_cast %7 : vector<1x64x128xf32> to vector<64x128xf32>
    %cst_5 = arith.constant dense<0.000000e+00> : vector<16x128xf32>
    %9 = tpu.matmul %6, %8, %cst_5 {dimension_numbers = #tpu.dot_dimension_numbers<[1], [0], [0], [1], [0, 0, 1, 1], [], []>} : vector<16x64xf32>, vector<64x128xf32>, vector<16x128xf32> -> vector<16x128xf32>
    %10 = vector.shape_cast %0 : vector<1x16x64xf32> to vector<16x64xf32>
    %c1 = arith.constant 1 : index
    %c0_6 = arith.constant 0 : index
    %c0_7 = arith.constant 0 : index
    %11 = vector.load %arg2[%c1, %c0_6, %c0_7] : memref<3x64x128xf32, #tpu.memory_space<vmem>>, vector<1x64x128xf32>
    %12 = vector.shape_cast %11 : vector<1x64x128xf32> to vector<64x128xf32>
    %cst_8 = arith.constant dense<0.000000e+00> : vector<16x128xf32>
    %13 = tpu.matmul %10, %12, %cst_8 {dimension_numbers = #tpu.dot_dimension_numbers<[1], [0], [0], [1], [0, 0, 1, 1], [], []>} : vector<16x64xf32>, vector<64x128xf32>, vector<16x128xf32> -> vector<16x128xf32>
    %14 = arith.addf %9, %13 : vector<16x128xf32>
    %15 = vector.shape_cast %5 : vector<1x16x64xf32> to vector<16x64xf32>
    %c2 = arith.constant 2 : index
    %c0_9 = arith.constant 0 : index
    %c0_10 = arith.constant 0 : index
    %16 = vector.load %arg2[%c2, %c0_9, %c0_10] : memref<3x64x128xf32, #tpu.memory_space<vmem>>, vector<1x64x128xf32>
    %17 = vector.shape_cast %16 : vector<1x64x128xf32> to vector<64x128xf32>
    %cst_11 = arith.constant dense<0.000000e+00> : vector<16x128xf32>
    %18 = tpu.matmul %15, %17, %cst_11 {dimension_numbers = #tpu.dot_dimension_numbers<[1], [0], [0], [1], [0, 0, 1, 1], [], []>} : vector<16x64xf32>, vector<64x128xf32>, vector<16x128xf32> -> vector<16x128xf32>
    %19 = arith.addf %14, %18 : vector<16x128xf32>
    %20 = vector.shape_cast %19 : vector<16x128xf32> to vector<1x16x128xf32>
    %cst_12 = arith.constant dense<0.000000e+00> : vector<1x128xf32>
    %21 = vector.multi_reduction <add>, %20, %cst_12 [1] : vector<1x16x128xf32> to vector<1x128xf32>
    %c0_13 = arith.constant 0 : index
    %c0_14 = arith.constant 0 : index
    %22 = vector.load %arg4[%c0_13, %c0_14] : memref<128x128xf32, #tpu.memory_space<vmem>>, vector<128x128xf32>
    %cst_15 = arith.constant dense<0.000000e+00> : vector<1x128xf32>
    %23 = tpu.matmul %21, %22, %cst_15 {dimension_numbers = #tpu.dot_dimension_numbers<[1], [0], [0], [1], [0, 0, 1, 1], [], []>} : vector<1x128xf32>, vector<128x128xf32>, vector<1x128xf32> -> vector<1x128xf32>
    %24 = vector.shape_cast %23 : vector<1x128xf32> to vector<1x1x128xf32>
    %25 = vector.broadcast %24 : vector<1x1x128xf32> to vector<1x16x128xf32>
    %26 = arith.subf %20, %25 : vector<1x16x128xf32>
    %27 = arith.mulf %26, %26 : vector<1x16x128xf32>
    %cst_16 = arith.constant dense<0.000000e+00> : vector<1x128xf32>
    %28 = vector.multi_reduction <add>, %27, %cst_16 [1] : vector<1x16x128xf32> to vector<1x128xf32>
    %c0_17 = arith.constant 0 : index
    %c0_18 = arith.constant 0 : index
    %29 = vector.load %arg4[%c0_17, %c0_18] : memref<128x128xf32, #tpu.memory_space<vmem>>, vector<128x128xf32>
    %cst_19 = arith.constant dense<0.000000e+00> : vector<1x128xf32>
    %30 = tpu.matmul %28, %29, %cst_19 {dimension_numbers = #tpu.dot_dimension_numbers<[1], [0], [0], [1], [0, 0, 1, 1], [], []>} : vector<1x128xf32>, vector<128x128xf32>, vector<1x128xf32> -> vector<1x128xf32>
    %cst_20 = arith.constant 9.99999974E-6 : f32
    %31 = vector.broadcast %cst_20 : f32 to vector<1x128xf32>
    %32 = arith.addf %30, %31 : vector<1x128xf32>
    %33 = math.rsqrt %32 : vector<1x128xf32>
    %34 = vector.shape_cast %33 : vector<1x128xf32> to vector<1x1x128xf32>
    %35 = vector.broadcast %34 : vector<1x1x128xf32> to vector<1x16x128xf32>
    %36 = arith.mulf %26, %35 : vector<1x16x128xf32>
    %cst_21 = arith.constant 0.000000e+00 : f32
    %37 = vector.broadcast %cst_21 : f32 to vector<1x16x128xf32>
    %38 = arith.maximumf %36, %37 : vector<1x16x128xf32>
    %cst_22 = arith.constant 0.000000e+00 : f32
    %39 = vector.broadcast %cst_22 : f32 to vector<1x1x128xf32>
    %40 = vector.extract_strided_slice %38 {offsets = [0, 0, 0], sizes = [1, 15, 128], strides = [1, 1, 1]} : vector<1x16x128xf32> to vector<1x15x128xf32>
    %41 = tpu.concatenate %39, %40 in 1 : vector<1x1x128xf32>, vector<1x15x128xf32> -> vector<1x16x128xf32>
    %42 = vector.extract_strided_slice %38 {offsets = [0, 1, 0], sizes = [1, 15, 128], strides = [1, 1, 1]} : vector<1x16x128xf32> to vector<1x15x128xf32>
    %43 = tpu.concatenate %42, %39 in 1 : vector<1x15x128xf32>, vector<1x1x128xf32> -> vector<1x16x128xf32>
    %44 = vector.shape_cast %41 : vector<1x16x128xf32> to vector<16x128xf32>
    %c0_23 = arith.constant 0 : index
    %c0_24 = arith.constant 0 : index
    %c0_25 = arith.constant 0 : index
    %45 = vector.load %arg3[%c0_23, %c0_24, %c0_25] : memref<3x128x128xf32, #tpu.memory_space<vmem>>, vector<1x128x128xf32>
    %46 = vector.shape_cast %45 : vector<1x128x128xf32> to vector<128x128xf32>
    %cst_26 = arith.constant dense<0.000000e+00> : vector<16x128xf32>
    %47 = tpu.matmul %44, %46, %cst_26 {dimension_numbers = #tpu.dot_dimension_numbers<[1], [0], [0], [1], [0, 0, 1, 1], [], []>} : vector<16x128xf32>, vector<128x128xf32>, vector<16x128xf32> -> vector<16x128xf32>
    %48 = vector.shape_cast %38 : vector<1x16x128xf32> to vector<16x128xf32>
    %c1_27 = arith.constant 1 : index
    %c0_28 = arith.constant 0 : index
    %c0_29 = arith.constant 0 : index
    %49 = vector.load %arg3[%c1_27, %c0_28, %c0_29] : memref<3x128x128xf32, #tpu.memory_space<vmem>>, vector<1x128x128xf32>
    %50 = vector.shape_cast %49 : vector<1x128x128xf32> to vector<128x128xf32>
    %cst_30 = arith.constant dense<0.000000e+00> : vector<16x128xf32>
    %51 = tpu.matmul %48, %50, %cst_30 {dimension_numbers = #tpu.dot_dimension_numbers<[1], [0], [0], [1], [0, 0, 1, 1], [], []>} : vector<16x128xf32>, vector<128x128xf32>, vector<16x128xf32> -> vector<16x128xf32>
    %52 = arith.addf %47, %51 : vector<16x128xf32>
    %53 = vector.shape_cast %43 : vector<1x16x128xf32> to vector<16x128xf32>
    %c2_31 = arith.constant 2 : index
    %c0_32 = arith.constant 0 : index
    %c0_33 = arith.constant 0 : index
    %54 = vector.load %arg3[%c2_31, %c0_32, %c0_33] : memref<3x128x128xf32, #tpu.memory_space<vmem>>, vector<1x128x128xf32>
    %55 = vector.shape_cast %54 : vector<1x128x128xf32> to vector<128x128xf32>
    %cst_34 = arith.constant dense<0.000000e+00> : vector<16x128xf32>
    %56 = tpu.matmul %53, %55, %cst_34 {dimension_numbers = #tpu.dot_dimension_numbers<[1], [0], [0], [1], [0, 0, 1, 1], [], []>} : vector<16x128xf32>, vector<128x128xf32>, vector<16x128xf32> -> vector<16x128xf32>
    %57 = arith.addf %52, %56 : vector<16x128xf32>
    %58 = vector.shape_cast %57 : vector<16x128xf32> to vector<1x16x128xf32>
    %cst_35 = arith.constant dense<0.000000e+00> : vector<1x128xf32>
    %59 = vector.multi_reduction <add>, %58, %cst_35 [1] : vector<1x16x128xf32> to vector<1x128xf32>
    %c0_36 = arith.constant 0 : index
    %c0_37 = arith.constant 0 : index
    %60 = vector.load %arg4[%c0_36, %c0_37] : memref<128x128xf32, #tpu.memory_space<vmem>>, vector<128x128xf32>
    %cst_38 = arith.constant dense<0.000000e+00> : vector<1x128xf32>
    %61 = tpu.matmul %59, %60, %cst_38 {dimension_numbers = #tpu.dot_dimension_numbers<[1], [0], [0], [1], [0, 0, 1, 1], [], []>} : vector<1x128xf32>, vector<128x128xf32>, vector<1x128xf32> -> vector<1x128xf32>
    %62 = vector.shape_cast %61 : vector<1x128xf32> to vector<1x1x128xf32>
    %63 = vector.broadcast %62 : vector<1x1x128xf32> to vector<1x16x128xf32>
    %64 = arith.subf %58, %63 : vector<1x16x128xf32>
    %65 = arith.mulf %64, %64 : vector<1x16x128xf32>
    %cst_39 = arith.constant dense<0.000000e+00> : vector<1x128xf32>
    %66 = vector.multi_reduction <add>, %65, %cst_39 [1] : vector<1x16x128xf32> to vector<1x128xf32>
    %c0_40 = arith.constant 0 : index
    %c0_41 = arith.constant 0 : index
    %67 = vector.load %arg4[%c0_40, %c0_41] : memref<128x128xf32, #tpu.memory_space<vmem>>, vector<128x128xf32>
    %cst_42 = arith.constant dense<0.000000e+00> : vector<1x128xf32>
    %68 = tpu.matmul %66, %67, %cst_42 {dimension_numbers = #tpu.dot_dimension_numbers<[1], [0], [0], [1], [0, 0, 1, 1], [], []>} : vector<1x128xf32>, vector<128x128xf32>, vector<1x128xf32> -> vector<1x128xf32>
    %cst_43 = arith.constant 9.99999974E-6 : f32
    %69 = vector.broadcast %cst_43 : f32 to vector<1x128xf32>
    %70 = arith.addf %68, %69 : vector<1x128xf32>
    %71 = math.rsqrt %70 : vector<1x128xf32>
    %72 = vector.shape_cast %71 : vector<1x128xf32> to vector<1x1x128xf32>
    %73 = vector.broadcast %72 : vector<1x1x128xf32> to vector<1x16x128xf32>
    %74 = arith.mulf %64, %73 : vector<1x16x128xf32>
    %cst_44 = arith.constant 0.000000e+00 : f32
    %75 = vector.broadcast %cst_44 : f32 to vector<1x16x128xf32>
    %76 = arith.maximumf %74, %75 : vector<1x16x128xf32>
    %c0_45 = arith.constant 0 : index
    %c0_46 = arith.constant 0 : index
    %c0_47 = arith.constant 0 : index
    %77 = vector.load %arg5[%c0_45, %c0_46, %c0_47] : memref<1x16x128xf32, #tpu.memory_space<vmem>>, vector<1x16x128xf32>
    tpu.vector_store %arg5[%c0_45, %c0_46, %c0_47], %76 {strides = array<i32>} : memref<1x16x128xf32, #tpu.memory_space<vmem>>, vector<1x16x128xf32>,
    return
  }
  func.func @transform_0(%arg0: i32) -> (i32, i32, i32) {
    %c0_i32 = arith.constant 0 : i32
    %c0_i32_0 = arith.constant 0 : i32
    %c0_i32_1 = arith.constant 0 : i32
    return %arg0, %c0_i32, %c0_i32_0 : i32, i32, i32
  }
  func.func @transform_1(%arg0: i32) -> (i32, i32, i32) {
    %c0_i32 = arith.constant 0 : i32
    %c0_i32_0 = arith.constant 0 : i32
    %c0_i32_1 = arith.constant 0 : i32
    %c0_i32_2 = arith.constant 0 : i32
    return %c0_i32, %c0_i32_0, %c0_i32_1 : i32, i32, i32
  }
  func.func @transform_2(%arg0: i32) -> (i32, i32, i32) {
    %c0_i32 = arith.constant 0 : i32
    %c0_i32_0 = arith.constant 0 : i32
    %c0_i32_1 = arith.constant 0 : i32
    %c0_i32_2 = arith.constant 0 : i32
    return %c0_i32, %c0_i32_0, %c0_i32_1 : i32, i32, i32
  }
  func.func @transform_3(%arg0: i32) -> (i32, i32) {
    %c0_i32 = arith.constant 0 : i32
    %c0_i32_0 = arith.constant 0 : i32
    %c0_i32_1 = arith.constant 0 : i32
    return %c0_i32, %c0_i32_0 : i32, i32
  }
  func.func @transform_4(%arg0: i32) -> (i32, i32, i32) {
    %c0_i32 = arith.constant 0 : i32
    %c0_i32_0 = arith.constant 0 : i32
    %c0_i32_1 = arith.constant 0 : i32
    return %arg0, %c0_i32, %c0_i32_0 : i32, i32, i32
  }
}

</mosaic_0001>

<llo_original>
// kernel: double_conv.1
$region0: #{double_conv.1}
  #allocation0 [shape = 'u32[]', space=smem, size = 0x4, offset = 0x4, fixed_abs, tag = 'smem constant byte address 0x4 - core index']
  #allocation1 [shape = 'u32[144,128]{1,0:T(1,128)}', space=vmem, size = 0x12000, scoped, tag = 'internal scratch']
  %s0 = inlined_call_operand.vmem [shape: f32[2,16,64], index: 0, kind: input, shape index: {}]
  %s1 = inlined_call_operand.vmem [shape: f32[3,64,128], index: 1, kind: input, shape index: {}]
  %s2 = inlined_call_operand.vmem [shape: f32[3,128,128], index: 2, kind: input, shape index: {}]
  %s3 = inlined_call_operand.vmem [shape: f32[128,128], index: 3, kind: input, shape index: {}]
  %s4 = inlined_call_operand.vmem [shape: f32[2,16,128], index: 4, kind: output, shape index: {}]
  %s5 = sld [smem:[#allocation0]]
  $region49: #{double_conv.1} parent=0
    _
  %s7 = ssub.s32 1, %s5
  %s8 = scalar_select 0, %s7, %s5
  loop: start=0, step=1, limit=4
  $region2: #{double_conv.1} parent=0 // loop_pre_header
    _
  $region3: #{double_conv.1} parent=0 // loop_header
    %s10 = sphi 0, %s14
    %p11 = scmp.ge.s32.totalorder %s10, 4
    %s20 = sphi 0, %s22
    %s23 = sphi 0, %s20
    %s24 = sphi 0, %s23
    %s40 = sphi 0, %s24
    %s44 = sphi 0, %s44
    %s46 = sphi 0, %s44
    %s47 = sphi 0, %s46
    %s61 = sphi 0, %s47
    %s65 = sphi 0, %s65
    %s67 = sphi 0, %s65
    %s68 = sphi 0, %s67
    %s82 = sphi 0, %s68
    %s86 = sphi 0, %s86
    %s88 = sphi 0, %s86
    %s89 = sphi 0, %s88
    %s103 = sphi 0, %s89
    %s109 = sphi 0, %s111
    %s112 = sphi 0, %s109
    %s113 = sphi 0, %s112
    %s129 = sphi 0, %s113
  $region4: #{double_conv.1} parent=0 // loop_header_branch
    %13 = sbr.rel (%p11) target = $region8
  $region5: #{double_conv.1} parent=0 // loop_body
    %s15 = ssub.s32 %s10, 1
    %s16 = ssub.s32 %s10, 2
    %s17 = sadd.s32 %s10, 1
    %s18 = ssub.s32 %s10, %s17
    %p19 = scmp.eq.s32.totalorder %s18, 0
    %s21 = sadd.s32 %s20, 1
    %s22 = scalar_select %p19, %s20, %s21
    %p25 = pneg %p19
    %p26 = scmp.eq.s32.totalorder %s10, 1
    %p27 = por %p25, %p26
    %p28 = scmp.ne.s32.totalorder %s20, %s23
    %p29 = scmp.eq.s32.totalorder %s10, 0
    %p30 = por %p28, %p29
    %p31 = scmp.ne.s32.totalorder %s20, %s23
    %p32 = scmp.eq.s32.totalorder %s15, 1
    %p33 = por %p31, %p32
    %p34 = scmp.ne.s32.totalorder %s23, %s24
    %p35 = scmp.eq.s32.totalorder %s15, 0
    %p36 = por %p34, %p35
    %p37 = scmp.ne.s32.totalorder %s23, %s24
    %p38 = scmp.eq.s32.totalorder %s16, 1
    %p39 = por %p37, %p38
    %p41 = scmp.ne.s32.totalorder %s24, %s40
    %p42 = scmp.eq.s32.totalorder %s16, 0
    %p43 = por %p41, %p42
    %s45 = sadd.s32 %s44, 1
    %p48 = scmp.eq.s32.totalorder %s10, 1
    %p49 = scmp.ne.s32.totalorder %s44, %s46
    %p50 = scmp.eq.s32.totalorder %s10, 0
    %p51 = por %p49, %p50
    %p52 = scmp.ne.s32.totalorder %s44, %s46
    %p53 = scmp.eq.s32.totalorder %s15, 1
    %p54 = por %p52, %p53
    %p55 = scmp.ne.s32.totalorder %s46, %s47
    %p56 = scmp.eq.s32.totalorder %s15, 0
    %p57 = por %p55, %p56
    %p58 = scmp.ne.s32.totalorder %s46, %s47
    %p59 = scmp.eq.s32.totalorder %s16, 1
    %p60 = por %p58, %p59
    %p62 = scmp.ne.s32.totalorder %s47, %s61
    %p63 = scmp.eq.s32.totalorder %s16, 0
    %p64 = por %p62, %p63
    %s66 = sadd.s32 %s65, 1
    %p69 = scmp.eq.s32.totalorder %s10, 1
    %p70 = scmp.ne.s32.totalorder %s65, %s67
    %p71 = scmp.eq.s32.totalorder %s10, 0
    %p72 = por %p70, %p71
    %p73 = scmp.ne.s32.totalorder %s65, %s67
    %p74 = scmp.eq.s32.totalorder %s15, 1
    %p75 = por %p73, %p74
    %p76 = scmp.ne.s32.totalorder %s67, %s68
    %p77 = scmp.eq.s32.totalorder %s15, 0
    %p78 = por %p76, %p77
    %p79 = scmp.ne.s32.totalorder %s67, %s68
    %p80 = scmp.eq.s32.totalorder %s16, 1
    %p81 = por %p79, %p80
    %p83 = scmp.ne.s32.totalorder %s68, %s82
    %p84 = scmp.eq.s32.totalorder %s16, 0
    %p85 = por %p83, %p84
    %s87 = sadd.s32 %s86, 1
    %p90 = scmp.eq.s32.totalorder %s10, 1
    %p91 = scmp.ne.s32.totalorder %s86, %s88
    %p92 = scmp.eq.s32.totalorder %s10, 0
    %p93 = por %p91, %p92
    %p94 = scmp.ne.s32.totalorder %s86, %s88
    %p95 = scmp.eq.s32.totalorder %s15, 1
    %p96 = por %p94, %p95
    %p97 = scmp.ne.s32.totalorder %s88, %s89
    %p98 = scmp.eq.s32.totalorder %s15, 0
    %p99 = por %p97, %p98
    %p100 = scmp.ne.s32.totalorder %s88, %s89
    %p101 = scmp.eq.s32.totalorder %s16, 1
    %p102 = por %p100, %p101
    %p104 = scmp.ne.s32.totalorder %s89, %s103
    %p105 = scmp.eq.s32.totalorder %s16, 0
    %p106 = por %p104, %p105
    %s107 = ssub.s32 %s10, %s17
    %p108 = scmp.eq.s32.totalorder %s107, 0
    %s110 = sadd.s32 %s109, 1
    %s111 = scalar_select %p108, %s109, %s110
    %p114 = pneg %p108
    %p115 = scmp.eq.s32.totalorder %s10, 1
    %p116 = por %p114, %p115
    %p117 = scmp.ne.s32.totalorder %s109, %s112
    %p118 = scmp.eq.s32.totalorder %s10, 0
    %p119 = por %p117, %p118
    %p120 = scmp.ne.s32.totalorder %s109, %s112
    %p121 = scmp.eq.s32.totalorder %s15, 1
    %p122 = por %p120, %p121
    %p123 = scmp.ne.s32.totalorder %s112, %s113
    %p124 = scmp.eq.s32.totalorder %s15, 0
    %p125 = por %p123, %p124
    %p126 = scmp.ne.s32.totalorder %s112, %s113
    %p127 = scmp.eq.s32.totalorder %s16, 1
    %p128 = por %p126, %p127
    %p130 = scmp.ne.s32.totalorder %s113, %s129
    %p131 = scmp.eq.s32.totalorder %s16, 0
    %p132 = por %p130, %p131
    %p133 = scmp.le.s32.totalorder 1, %s10
    %p134 = scmp.lt.s32.totalorder %s10, 3
    %p135 = pnand %p133, %p134
    %p136 = pneg %p135
    // Predicated region
    $region9: #{double_conv.1} parent=5 // pred_check
      _
    $region10: #{double_conv.1} parent=5 // pred_check_branch
      %138 = sbr.rel (%p135) target = $region12
    $region11: #{double_conv.1} parent=5 // pred_region
      %s139 = ssub.s32 %s10, 1
      // Predicated region
      $region13: #{double_conv.1} parent=11 // pred_check
        %p140 = pneg %p57
      $region14: #{double_conv.1} parent=11 // pred_check_branch
        %142 = sbr.rel (%p140) target = $region16
      $region15: #{double_conv.1} parent=11 // pred_region
        _
      $region16: #{double_conv.1} parent=11 // pred_fallthru
        _
      // Predicated region
      $region17: #{double_conv.1} parent=11 // pred_check
        %p143 = pneg %p78
      $region18: #{double_conv.1} parent=11 // pred_check_branch
        %145 = sbr.rel (%p143) target = $region20
      $region19: #{double_conv.1} parent=11 // pred_region
        _
      $region20: #{double_conv.1} parent=11 // pred_fallthru
        _
      // Predicated region
      $region21: #{double_conv.1} parent=11 // pred_check
        %p146 = pneg %p99
      $region22: #{double_conv.1} parent=11 // pred_check_branch
        %148 = sbr.rel (%p146) target = $region24
      $region23: #{double_conv.1} parent=11 // pred_region
        _
      $region24: #{double_conv.1} parent=11 // pred_fallthru
        _
    $region12: #{double_conv.1} parent=5 // pred_fallthru
      _
    %p149 = scmp.lt.s32.totalorder %s10, 2
    // Predicated region
    $region25: #{double_conv.1} parent=5 // pred_check
      %p150 = pneg %p149
    $region26: #{double_conv.1} parent=5 // pred_check_branch
      %152 = sbr.rel (%p150) target = $region28
    $region27: #{double_conv.1} parent=5 // pred_region
      // Predicated region
      $region29: #{double_conv.1} parent=27 // pred_check
        %p153 = pneg %p30
      $region30: #{double_conv.1} parent=27 // pred_check_branch
        %155 = sbr.rel (%p153) target = $region32
      $region31: #{double_conv.1} parent=27 // pred_region
        %p156 = scmp.lt.s32.totalorder %s10, 1
        %s157 = scalar_select %p156, %s10, 1
        %s158 = smul.addr %s157, 2
        %s159 = smul.addr %s158, 8
        %s160 = scalar_lea.vmem %s0, %s159
      $region32: #{double_conv.1} parent=27 // pred_fallthru
        _
    $region28: #{double_conv.1} parent=5 // pred_fallthru
      _
    %p161 = scmp.le.s32.totalorder 1, %s10
    %p162 = scmp.lt.s32.totalorder %s10, 3
    %p163 = pnand %p161, %p162
    %p164 = pneg %p163
    // Predicated region
    $region33: #{double_conv.1} parent=5 // pred_check
      _
    $region34: #{double_conv.1} parent=5 // pred_check_branch
      %166 = sbr.rel (%p163) target = $region36
    $region35: #{double_conv.1} parent=5 // pred_region
      %s167 = ssub.s32 %s10, 1
      %p168 = scmp.lt.s32.totalorder %s15, 1
      %s169 = scalar_select %p168, %s15, 1
      %s170 = smul.addr %s169, 2
      %s171 = smul.addr %s170, 8
      %s172 = scalar_lea.vmem %s0, %s171
      %p173 = pneg %p36
      %p174 = pneg %p33
      %p175 = pneg %p57
      %p176 = pneg %p54
      %p177 = pneg %p78
      %p178 = pneg %p75
      %p179 = pneg %p99
      %p180 = pneg %p96
      %p181 = pneg %p125
      %p182 = pneg %p122
      %p183 = scmp.lt.s32.totalorder %s15, 1
      %s184 = scalar_select %p183, %s15, 1
      %s185 = smul.addr %s184, 2
      %s186 = smul.addr %s185, 8
      %s187 = scalar_lea.vmem %s4, %s186
      %p188 = scmp.lt.s32.totalorder %s15, 1
      %s189 = scalar_select %p188, %s15, 1
      %s190 = smul.addr %s189, 2
      %s191 = smul.addr %s190, 8
      %s192 = scalar_lea.vmem %s0, %s191
      %p193 = scmp.lt.s32.totalorder %s15, 1
      %s194 = scalar_select %p193, %s15, 1
      %s195 = smul.addr %s194, 2
      %s196 = smul.addr %s195, 8
      %s197 = scalar_lea.vmem %s4, %s196
      %v198 = vld [vmem:[%s192] sm:$0xff]
      %v199 = vld [vmem:[%s192 + $0x8] sm:$0xff]
      %vm202 = vcmask 1040384
      %v203 = vrot.slane %v198, 7
      %v204 = vrot.slane %v199, 7
      %v205 = vsel %vm202, %v203, %v204
      %v207 = vsel %vm202, 0.0, %v203
      %vm208 = vcmask 1046528
      %v209 = vrot.slane %v198, 1
      %v210 = vrot.slane %v199, 1
      %v211 = vsel %vm208, %v209, %v210
      %v213 = vsel %vm208, %v210, 0.0
      %v214 = vld [vmem:[%s1] sm:$0xff]
      %v215 = vld [vmem:[%s1 + $0x8] sm:$0xff]
      %v216 = vld [vmem:[%s1 + $0x10] sm:$0xff]
      %v217 = vld [vmem:[%s1 + $0x18] sm:$0xff]
      %v218 = vld [vmem:[%s1 + $0x20] sm:$0xff]
      %v219 = vld [vmem:[%s1 + $0x28] sm:$0xff]
      %v220 = vld [vmem:[%s1 + $0x30] sm:$0xff]
      %v221 = vld [vmem:[%s1 + $0x38] sm:$0xff]
      %s222 = scalar_lea.vmem %s1, 64
      %v223 = vld [vmem:[%s222] sm:$0xff]
      %v224 = vld [vmem:[%s222 + $0x8] sm:$0xff]
      %v225 = vld [vmem:[%s222 + $0x10] sm:$0xff]
      %v226 = vld [vmem:[%s222 + $0x18] sm:$0xff]
      %v227 = vld [vmem:[%s222 + $0x20] sm:$0xff]
      %v228 = vld [vmem:[%s222 + $0x28] sm:$0xff]
      %v229 = vld [vmem:[%s222 + $0x30] sm:$0xff]
      %v230 = vld [vmem:[%s222 + $0x38] sm:$0xff]
      %vm231 = vcmask 523264
      %v232 = vsel %vm231, %v198, 0
      %v234 = vsel %vm231, %v199, 0
      %236 = vmatprep.subr.mxu0 0.0
      %237 = vmatpush1.msra.mxu0 0.0
      %238 = vmatprep.subr.mxu0 0.0
      %239 = vmatpush1.msra.mxu0 0.0
      %240 = vmatprep.subr.mxu0 0.0
      %241 = vmatpush1.msra.mxu0 0.0
      %242 = vmatprep.subr.mxu0 0.0
      %243 = vmatpush1.msra.mxu0 0.0
      %244 = vmatprep.subr.mxu0 0.0
      %245 = vmatpush1.msra.mxu0 0.0
      %246 = vmatprep.subr.mxu0 0.0
      %247 = vmatpush1.msra.mxu0 0.0
      %248 = vmatprep.subr.mxu0 0.0
      %249 = vmatpush1.msra.mxu0 0.0
      %250 = vmatprep.subr.mxu0 0.0
      %251 = vmatpush1.msra.mxu0 0.0
      %252 = vmatprep.subr.mxu0 0.0
      %253 = vmatpush1.msra.mxu0 %v230
      %254 = vmatprep.subr.mxu0 0.0
      %255 = vmatpush1.msra.mxu0 %v229
      %256 = vmatprep.subr.mxu0 0.0
      %257 = vmatpush1.msra.mxu0 %v228
      %258 = vmatprep.subr.mxu0 0.0
      %259 = vmatpush1.msra.mxu0 %v227
      %260 = vmatprep.subr.mxu0 0.0
      %261 = vmatpush1.msra.mxu0 %v226
      %262 = vmatprep.subr.mxu0 0.0
      %263 = vmatpush1.msra.mxu0 %v225
      %264 = vmatprep.subr.mxu0 0.0
      %265 = vmatpush1.msra.mxu0 %v224
      %266 = vmatprep.subr.mxu0 0.0
      %267 = vmatpush1.msra.mxu0 %v223
      %268 = vmatprep.subr.mxu0 0.0
      %269 = vmatpush2.msra.mxu0 0.0
      %270 = vmatprep.subr.mxu0 0.0
      %271 = vmatpush2.msra.mxu0 0.0
      %272 = vmatprep.subr.mxu0 0.0
      %273 = vmatpush2.msra.mxu0 0.0
      %274 = vmatprep.subr.mxu0 0.0
      %275 = vmatpush2.msra.mxu0 0.0
      %276 = vmatprep.subr.mxu0 0.0
      %277 = vmatpush2.msra.mxu0 0.0
      %278 = vmatprep.subr.mxu0 0.0
      %279 = vmatpush2.msra.mxu0 0.0
      %280 = vmatprep.subr.mxu0 0.0
      %281 = vmatpush2.msra.mxu0 0.0
      %282 = vmatprep.subr.mxu0 0.0
      %283 = vmatpush2.msra.mxu0 0.0
      %284 = vmatprep.subr.mxu0 0.0
      %285 = vmatpush2.msra.mxu0 0.0
      %286 = vmatprep.subr.mxu0 0.0
      %287 = vmatpush2.msra.mxu0 0.0
      %288 = vmatprep.subr.mxu0 0.0
      %289 = vmatpush2.msra.mxu0 0.0
      %290 = vmatprep.subr.mxu0 0.0
      %291 = vmatpush2.msra.mxu0 0.0
      %292 = vmatprep.subr.mxu0 0.0
      %293 = vmatpush2.msra.mxu0 0.0
      %294 = vmatprep.subr.mxu0 0.0
      %295 = vmatpush2.msra.mxu0 0.0
      %296 = vmatprep.subr.mxu0 0.0
      %297 = vmatpush2.msra.mxu0 0.0
      %298 = vmatprep.subr.mxu0 0.0
      %299 = vmatpush2.msra.mxu0 0.0
      %300 = vmatprep.mubr.f32.mxu0 0.0
      %301 = vmatmul.mubr.f32.gmra.mxu0 %v232
      %v302 = vpop.f32.mrf.mxu0
      %v303 = vadd.f32 0.0, %v302
      %v304 = vpop.f32.mrf.mxu0
      %305 = vmatprep.mubr.f32.mxu0 0.0
      %306 = vmatmul.mubr.f32.gmra.mxu0 %v234
      %v307 = vpop.f32.mrf.mxu0
      %v308 = vadd.f32 0.0, %v307
      %v309 = vpop.f32.mrf.mxu0
      %310 = vdwg.mxu0
      %v312 = vsel %vm231, %v207, 0
      %v314 = vsel %vm231, %v205, 0
      %316 = vmatprep.subr.mxu0 0.0
      %317 = vmatpush1.msra.mxu0 0.0
      %318 = vmatprep.subr.mxu0 0.0
      %319 = vmatpush1.msra.mxu0 0.0
      %320 = vmatprep.subr.mxu0 0.0
      %321 = vmatpush1.msra.mxu0 0.0
      %322 = vmatprep.subr.mxu0 0.0
      %323 = vmatpush1.msra.mxu0 0.0
      %324 = vmatprep.subr.mxu0 0.0
      %325 = vmatpush1.msra.mxu0 0.0
      %326 = vmatprep.subr.mxu0 0.0
      %327 = vmatpush1.msra.mxu0 0.0
      %328 = vmatprep.subr.mxu0 0.0
      %329 = vmatpush1.msra.mxu0 0.0
      %330 = vmatprep.subr.mxu0 0.0
      %331 = vmatpush1.msra.mxu0 0.0
      %332 = vmatprep.subr.mxu0 0.0
      %333 = vmatpush1.msra.mxu0 %v221
      %334 = vmatprep.subr.mxu0 0.0
      %335 = vmatpush1.msra.mxu0 %v220
      %336 = vmatprep.subr.mxu0 0.0
      %337 = vmatpush1.msra.mxu0 %v219
      %338 = vmatprep.subr.mxu0 0.0
      %339 = vmatpush1.msra.mxu0 %v218
      %340 = vmatprep.subr.mxu0 0.0
      %341 = vmatpush1.msra.mxu0 %v217
      %342 = vmatprep.subr.mxu0 0.0
      %343 = vmatpush1.msra.mxu0 %v216
      %344 = vmatprep.subr.mxu0 0.0
      %345 = vmatpush1.msra.mxu0 %v215
      %346 = vmatprep.subr.mxu0 0.0
      %347 = vmatpush1.msra.mxu0 %v214
      %348 = vmatprep.subr.mxu0 0.0
      %349 = vmatpush2.msra.mxu0 0.0
      %350 = vmatprep.subr.mxu0 0.0
      %351 = vmatpush2.msra.mxu0 0.0
      %352 = vmatprep.subr.mxu0 0.0
      %353 = vmatpush2.msra.mxu0 0.0
      %354 = vmatprep.subr.mxu0 0.0
      %355 = vmatpush2.msra.mxu0 0.0
      %356 = vmatprep.subr.mxu0 0.0
      %357 = vmatpush2.msra.mxu0 0.0
      %358 = vmatprep.subr.mxu0 0.0
      %359 = vmatpush2.msra.mxu0 0.0
      %360 = vmatprep.subr.mxu0 0.0
      %361 = vmatpush2.msra.mxu0 0.0
      %362 = vmatprep.subr.mxu0 0.0
      %363 = vmatpush2.msra.mxu0 0.0
      %364 = vmatprep.subr.mxu0 0.0
      %365 = vmatpush2.msra.mxu0 0.0
      %366 = vmatprep.subr.mxu0 0.0
      %367 = vmatpush2.msra.mxu0 0.0
      %368 = vmatprep.subr.mxu0 0.0
      %369 = vmatpush2.msra.mxu0 0.0
      %370 = vmatprep.subr.mxu0 0.0
      %371 = vmatpush2.msra.mxu0 0.0
      %372 = vmatprep.subr.mxu0 0.0
      %373 = vmatpush2.msra.mxu0 0.0
      %374 = vmatprep.subr.mxu0 0.0
      %375 = vmatpush2.msra.mxu0 0.0
      %376 = vmatprep.subr.mxu0 0.0
      %377 = vmatpush2.msra.mxu0 0.0
      %378 = vmatprep.subr.mxu0 0.0
      %379 = vmatpush2.msra.mxu0 0.0
      %380 = vmatprep.mubr.f32.mxu0 0.0
      %381 = vmatmul.mubr.f32.gmra.mxu0 %v312
      %v382 = vpop.f32.mrf.mxu0
      %v383 = vadd.f32 %v303, %v382
      %v384 = vpop.f32.mrf.mxu0
      %385 = vmatprep.mubr.f32.mxu0 0.0
      %386 = vmatmul.mubr.f32.gmra.mxu0 %v314
      %v387 = vpop.f32.mrf.mxu0
      %v388 = vadd.f32 %v308, %v387
      %v389 = vpop.f32.mrf.mxu0
      %390 = vdwg.mxu0
      %s391 = scalar_lea.vmem %s1, 128
      %v392 = vld [vmem:[%s391] sm:$0xff]
      %v393 = vld [vmem:[%s391 + $0x8] sm:$0xff]
      %v394 = vld [vmem:[%s391 + $0x10] sm:$0xff]
      %v395 = vld [vmem:[%s391 + $0x18] sm:$0xff]
      %v396 = vld [vmem:[%s391 + $0x20] sm:$0xff]
      %v397 = vld [vmem:[%s391 + $0x28] sm:$0xff]
      %v398 = vld [vmem:[%s391 + $0x30] sm:$0xff]
      %v399 = vld [vmem:[%s391 + $0x38] sm:$0xff]
      %v400 = vsel %vm231, %v211, 0
      %v403 = vsel %vm231, %v213, 0
      %405 = vmatprep.subr.mxu0 0.0
      %406 = vmatpush1.msra.mxu0 0.0
      %407 = vmatprep.subr.mxu0 0.0
      %408 = vmatpush1.msra.mxu0 0.0
      %409 = vmatprep.subr.mxu0 0.0
      %410 = vmatpush1.msra.mxu0 0.0
      %411 = vmatprep.subr.mxu0 0.0
      %412 = vmatpush1.msra.mxu0 0.0
      %413 = vmatprep.subr.mxu0 0.0
      %414 = vmatpush1.msra.mxu0 0.0
      %415 = vmatprep.subr.mxu0 0.0
      %416 = vmatpush1.msra.mxu0 0.0
      %417 = vmatprep.subr.mxu0 0.0
      %418 = vmatpush1.msra.mxu0 0.0
      %419 = vmatprep.subr.mxu0 0.0
      %420 = vmatpush1.msra.mxu0 0.0
      %421 = vmatprep.subr.mxu0 0.0
      %422 = vmatpush1.msra.mxu0 %v399
      %423 = vmatprep.subr.mxu0 0.0
      %424 = vmatpush1.msra.mxu0 %v398
      %425 = vmatprep.subr.mxu0 0.0
      %426 = vmatpush1.msra.mxu0 %v397
      %427 = vmatprep.subr.mxu0 0.0
      %428 = vmatpush1.msra.mxu0 %v396
      %429 = vmatprep.subr.mxu0 0.0
      %430 = vmatpush1.msra.mxu0 %v395
      %431 = vmatprep.subr.mxu0 0.0
      %432 = vmatpush1.msra.mxu0 %v394
      %433 = vmatprep.subr.mxu0 0.0
      %434 = vmatpush1.msra.mxu0 %v393
      %435 = vmatprep.subr.mxu0 0.0
      %436 = vmatpush1.msra.mxu0 %v392
      %437 = vmatprep.subr.mxu0 0.0
      %438 = vmatpush2.msra.mxu0 0.0
      %439 = vmatprep.subr.mxu0 0.0
      %440 = vmatpush2.msra.mxu0 0.0
      %441 = vmatprep.subr.mxu0 0.0
      %442 = vmatpush2.msra.mxu0 0.0
      %443 = vmatprep.subr.mxu0 0.0
      %444 = vmatpush2.msra.mxu0 0.0
      %445 = vmatprep.subr.mxu0 0.0
      %446 = vmatpush2.msra.mxu0 0.0
      %447 = vmatprep.subr.mxu0 0.0
      %448 = vmatpush2.msra.mxu0 0.0
      %449 = vmatprep.subr.mxu0 0.0
      %450 = vmatpush2.msra.mxu0 0.0
      %451 = vmatprep.subr.mxu0 0.0
      %452 = vmatpush2.msra.mxu0 0.0
      %453 = vmatprep.subr.mxu0 0.0
      %454 = vmatpush2.msra.mxu0 0.0
      %455 = vmatprep.subr.mxu0 0.0
      %456 = vmatpush2.msra.mxu0 0.0
      %457 = vmatprep.subr.mxu0 0.0
      %458 = vmatpush2.msra.mxu0 0.0
      %459 = vmatprep.subr.mxu0 0.0
      %460 = vmatpush2.msra.mxu0 0.0
      %461 = vmatprep.subr.mxu0 0.0
      %462 = vmatpush2.msra.mxu0 0.0
      %463 = vmatprep.subr.mxu0 0.0
      %464 = vmatpush2.msra.mxu0 0.0
      %465 = vmatprep.subr.mxu0 0.0
      %466 = vmatpush2.msra.mxu0 0.0
      %467 = vmatprep.subr.mxu0 0.0
      %468 = vmatpush2.msra.mxu0 0.0
      %469 = vmatprep.mubr.f32.mxu0 0.0
      %470 = vmatmul.mubr.f32.gmra.mxu0 %v400
      %v471 = vpop.f32.mrf.mxu0
      %v472 = vadd.f32 0.0, %v471
      %v473 = vpop.f32.mrf.mxu0
      %474 = vmatprep.mubr.f32.mxu0 0.0
      %475 = vmatmul.mubr.f32.gmra.mxu0 %v403
      %v476 = vpop.f32.mrf.mxu0
      %v477 = vadd.f32 0.0, %v476
      %v478 = vpop.f32.mrf.mxu0
      %479 = vdwg.mxu0
      %v480 = vadd.f32 %v383, %v472
      %v481 = vadd.f32 %v388, %v477
      %v482 = vadd.f32 %v480, %v481
      %v483 = vrot.slane %v482, 4
      %v484 = vadd.f32 %v482, %v483
      %v485 = vrot.slane %v484, 2
      %v486 = vadd.f32 %v484, %v485
      %v487 = vrot.slane %v486, 1
      %v488 = vadd.f32 %v486, %v487
      %v489 = vld [vmem:[%s3] sm:$0xff]
      %v490 = vld [vmem:[%s3 + $0x8] sm:$0xff]
      %v491 = vld [vmem:[%s3 + $0x10] sm:$0xff]
      %v492 = vld [vmem:[%s3 + $0x18] sm:$0xff]
      %v493 = vld [vmem:[%s3 + $0x20] sm:$0xff]
      %v494 = vld [vmem:[%s3 + $0x28] sm:$0xff]
      %v495 = vld [vmem:[%s3 + $0x30] sm:$0xff]
      %v496 = vld [vmem:[%s3 + $0x38] sm:$0xff]
      %v497 = vld [vmem:[%s3 + $0x40] sm:$0xff]
      %v498 = vld [vmem:[%s3 + $0x48] sm:$0xff]
      %v499 = vld [vmem:[%s3 + $0x50] sm:$0xff]
      %v500 = vld [vmem:[%s3 + $0x58] sm:$0xff]
      %v501 = vld [vmem:[%s3 + $0x60] sm:$0xff]
      %v502 = vld [vmem:[%s3 + $0x68] sm:$0xff]
      %v503 = vld [vmem:[%s3 + $0x70] sm:$0xff]
      %v504 = vld [vmem:[%s3 + $0x78] sm:$0xff]
      %505 = vmatprep.subr.mxu0 0.0
      %506 = vmatpush1.msra.mxu0 %v504
      %507 = vmatprep.subr.mxu0 0.0
      %508 = vmatpush1.msra.mxu0 %v503
      %509 = vmatprep.subr.mxu0 0.0
      %510 = vmatpush1.msra.mxu0 %v502
      %511 = vmatprep.subr.mxu0 0.0
      %512 = vmatpush1.msra.mxu0 %v501
      %513 = vmatprep.subr.mxu0 0.0
      %514 = vmatpush1.msra.mxu0 %v500
      %515 = vmatprep.subr.mxu0 0.0
      %516 = vmatpush1.msra.mxu0 %v499
      %517 = vmatprep.subr.mxu0 0.0
      %518 = vmatpush1.msra.mxu0 %v498
      %519 = vmatprep.subr.mxu0 0.0
      %520 = vmatpush1.msra.mxu0 %v497
      %521 = vmatprep.subr.mxu0 0.0
      %522 = vmatpush1.msra.mxu0 %v496
      %523 = vmatprep.subr.mxu0 0.0
      %524 = vmatpush1.msra.mxu0 %v495
      %525 = vmatprep.subr.mxu0 0.0
      %526 = vmatpush1.msra.mxu0 %v494
      %527 = vmatprep.subr.mxu0 0.0
      %528 = vmatpush1.msra.mxu0 %v493
      %529 = vmatprep.subr.mxu0 0.0
      %530 = vmatpush1.msra.mxu0 %v492
      %531 = vmatprep.subr.mxu0 0.0
      %532 = vmatpush1.msra.mxu0 %v491
      %533 = vmatprep.subr.mxu0 0.0
      %534 = vmatpush1.msra.mxu0 %v490
      %535 = vmatprep.subr.mxu0 0.0
      %536 = vmatpush1.msra.mxu0 %v489
      %537 = vmatprep.subr.mxu0 0.0
      %538 = vmatpush2.msra.mxu0 0.0
      %539 = vmatprep.subr.mxu0 0.0
      %540 = vmatpush2.msra.mxu0 0.0
      %541 = vmatprep.subr.mxu0 0.0
      %542 = vmatpush2.msra.mxu0 0.0
      %543 = vmatprep.subr.mxu0 0.0
      %544 = vmatpush2.msra.mxu0 0.0
      %545 = vmatprep.subr.mxu0 0.0
      %546 = vmatpush2.msra.mxu0 0.0
      %547 = vmatprep.subr.mxu0 0.0
      %548 = vmatpush2.msra.mxu0 0.0
      %549 = vmatprep.subr.mxu0 0.0
      %550 = vmatpush2.msra.mxu0 0.0
      %551 = vmatprep.subr.mxu0 0.0
      %552 = vmatpush2.msra.mxu0 0.0
      %553 = vmatprep.subr.mxu0 0.0
      %554 = vmatpush2.msra.mxu0 0.0
      %555 = vmatprep.subr.mxu0 0.0
      %556 = vmatpush2.msra.mxu0 0.0
      %557 = vmatprep.subr.mxu0 0.0
      %558 = vmatpush2.msra.mxu0 0.0
      %559 = vmatprep.subr.mxu0 0.0
      %560 = vmatpush2.msra.mxu0 0.0
      %561 = vmatprep.subr.mxu0 0.0
      %562 = vmatpush2.msra.mxu0 0.0
      %563 = vmatprep.subr.mxu0 0.0
      %564 = vmatpush2.msra.mxu0 0.0
      %565 = vmatprep.subr.mxu0 0.0
      %566 = vmatpush2.msra.mxu0 0.0
      %567 = vmatprep.subr.mxu0 0.0
      %568 = vmatpush2.msra.mxu0 0.0
      %569 = vmatprep.mubr.f32.mxu0 0.0
      %570 = vmatmul.mubr.f32.gmra.mxu0 %v488
      %v571 = vpop.f32.mrf.mxu0
      %v572 = vadd.f32 0.0, %v571
      %v573 = vpop.f32.mrf.mxu0
      %574 = vdwg.mxu0
      %v575 = vlaneseq
      %v576 = vshrl.u32 %v575, 7
      %v577 = vsub.s32 0, %v576
      %v578 = vrot.slane %v572, %v577
      %v579 = vsub.f32 %v480, %v578
      %v580 = vsub.f32 %v481, %v578
      %v581 = vmul.f32 %v579, %v579
      %v582 = vmul.f32 %v580, %v580
      %v583 = vadd.f32 %v581, %v582
      %v584 = vrot.slane %v583, 4
      %v585 = vadd.f32 %v583, %v584
      %v586 = vrot.slane %v585, 2
      %v587 = vadd.f32 %v585, %v586
      %v588 = vrot.slane %v587, 1
      %v589 = vadd.f32 %v587, %v588
      %590 = vmatprep.subr.mxu0 0.0
      %591 = vmatpush1.msra.mxu0 %v504
      %592 = vmatprep.subr.mxu0 0.0
      %593 = vmatpush1.msra.mxu0 %v503
      %594 = vmatprep.subr.mxu0 0.0
      %595 = vmatpush1.msra.mxu0 %v502
      %596 = vmatprep.subr.mxu0 0.0
      %597 = vmatpush1.msra.mxu0 %v501
      %598 = vmatprep.subr.mxu0 0.0
      %599 = vmatpush1.msra.mxu0 %v500
      %600 = vmatprep.subr.mxu0 0.0
      %601 = vmatpush1.msra.mxu0 %v499
      %602 = vmatprep.subr.mxu0 0.0
      %603 = vmatpush1.msra.mxu0 %v498
      %604 = vmatprep.subr.mxu0 0.0
      %605 = vmatpush1.msra.mxu0 %v497
      %606 = vmatprep.subr.mxu0 0.0
      %607 = vmatpush1.msra.mxu0 %v496
      %608 = vmatprep.subr.mxu0 0.0
      %609 = vmatpush1.msra.mxu0 %v495
      %610 = vmatprep.subr.mxu0 0.0
      %611 = vmatpush1.msra.mxu0 %v494
      %612 = vmatprep.subr.mxu0 0.0
      %613 = vmatpush1.msra.mxu0 %v493
      %614 = vmatprep.subr.mxu0 0.0
      %615 = vmatpush1.msra.mxu0 %v492
      %616 = vmatprep.subr.mxu0 0.0
      %617 = vmatpush1.msra.mxu0 %v491
      %618 = vmatprep.subr.mxu0 0.0
      %619 = vmatpush1.msra.mxu0 %v490
      %620 = vmatprep.subr.mxu0 0.0
      %621 = vmatpush1.msra.mxu0 %v489
      %622 = vmatprep.subr.mxu0 0.0
      %623 = vmatpush2.msra.mxu0 0.0
      %624 = vmatprep.subr.mxu0 0.0
      %625 = vmatpush2.msra.mxu0 0.0
      %626 = vmatprep.subr.mxu0 0.0
      %627 = vmatpush2.msra.mxu0 0.0
      %628 = vmatprep.subr.mxu0 0.0
      %629 = vmatpush2.msra.mxu0 0.0
      %630 = vmatprep.subr.mxu0 0.0
      %631 = vmatpush2.msra.mxu0 0.0
      %632 = vmatprep.subr.mxu0 0.0
      %633 = vmatpush2.msra.mxu0 0.0
      %634 = vmatprep.subr.mxu0 0.0
      %635 = vmatpush2.msra.mxu0 0.0
      %636 = vmatprep.subr.mxu0 0.0
      %637 = vmatpush2.msra.mxu0 0.0
      %638 = vmatprep.subr.mxu0 0.0
      %639 = vmatpush2.msra.mxu0 0.0
      %640 = vmatprep.subr.mxu0 0.0
      %641 = vmatpush2.msra.mxu0 0.0
      %642 = vmatprep.subr.mxu0 0.0
      %643 = vmatpush2.msra.mxu0 0.0
      %644 = vmatprep.subr.mxu0 0.0
      %645 = vmatpush2.msra.mxu0 0.0
      %646 = vmatprep.subr.mxu0 0.0
      %647 = vmatpush2.msra.mxu0 0.0
      %648 = vmatprep.subr.mxu0 0.0
      %649 = vmatpush2.msra.mxu0 0.0
      %650 = vmatprep.subr.mxu0 0.0
      %651 = vmatpush2.msra.mxu0 0.0
      %652 = vmatprep.subr.mxu0 0.0
      %653 = vmatpush2.msra.mxu0 0.0
      %654 = vmatprep.mubr.f32.mxu0 0.0
      %655 = vmatmul.mubr.f32.gmra.mxu0 %v589
      %v656 = vpop.f32.mrf.mxu0
      %v657 = vadd.f32 1e-05, %v656
      %v658 = vpop.f32.mrf.mxu0
      %659 = vdwg.mxu0
      %v660 = vrsqrt.pop %v657
      %v661 = vlaneseq
      %v662 = vshrl.u32 %v661, 7
      %v663 = vsub.s32 0, %v662
      %v664 = vrot.slane %v660, %v663
      %v665 = vmul.f32 %v579, %v664
      %v666 = vmul.f32 %v580, %v664
      %v667 = vmax.f32 %v665, 0.0
      %v668 = vmax.f32 %v666, 0.0
      %v671 = vrot.slane %v667, 7
      %v672 = vrot.slane %v668, 7
      %v673 = vsel %vm202, %v671, %v672
      %v676 = vsel %vm202, 0.0, %v671
      %v677 = vrot.slane %v667, 1
      %v678 = vrot.slane %v668, 1
      %v679 = vsel %vm208, %v677, %v678
      %v682 = vsel %vm208, %v678, 0.0
      %v683 = vld [vmem:[%s2] sm:$0xff]
      %v684 = vld [vmem:[%s2 + $0x8] sm:$0xff]
      %v685 = vld [vmem:[%s2 + $0x10] sm:$0xff]
      %v686 = vld [vmem:[%s2 + $0x18] sm:$0xff]
      %v687 = vld [vmem:[%s2 + $0x20] sm:$0xff]
      %v688 = vld [vmem:[%s2 + $0x28] sm:$0xff]
      %v689 = vld [vmem:[%s2 + $0x30] sm:$0xff]
      %v690 = vld [vmem:[%s2 + $0x38] sm:$0xff]
      %v691 = vld [vmem:[%s2 + $0x40] sm:$0xff]
      %v692 = vld [vmem:[%s2 + $0x48] sm:$0xff]
      %v693 = vld [vmem:[%s2 + $0x50] sm:$0xff]
      %v694 = vld [vmem:[%s2 + $0x58] sm:$0xff]
      %v695 = vld [vmem:[%s2 + $0x60] sm:$0xff]
      %v696 = vld [vmem:[%s2 + $0x68] sm:$0xff]
      %v697 = vld [vmem:[%s2 + $0x70] sm:$0xff]
      %v698 = vld [vmem:[%s2 + $0x78] sm:$0xff]
      %s699 = scalar_lea.vmem %s2, 128
      %v700 = vld [vmem:[%s699] sm:$0xff]
      %v701 = vld [vmem:[%s699 + $0x8] sm:$0xff]
      %v702 = vld [vmem:[%s699 + $0x10] sm:$0xff]
      %v703 = vld [vmem:[%s699 + $0x18] sm:$0xff]
      %v704 = vld [vmem:[%s699 + $0x20] sm:$0xff]
      %v705 = vld [vmem:[%s699 + $0x28] sm:$0xff]
      %v706 = vld [vmem:[%s699 + $0x30] sm:$0xff]
      %v707 = vld [vmem:[%s699 + $0x38] sm:$0xff]
      %v708 = vld [vmem:[%s699 + $0x40] sm:$0xff]
      %v709 = vld [vmem:[%s699 + $0x48] sm:$0xff]
      %v710 = vld [vmem:[%s699 + $0x50] sm:$0xff]
      %v711 = vld [vmem:[%s699 + $0x58] sm:$0xff]
      %v712 = vld [vmem:[%s699 + $0x60] sm:$0xff]
      %v713 = vld [vmem:[%s699 + $0x68] sm:$0xff]
      %v714 = vld [vmem:[%s699 + $0x70] sm:$0xff]
      %v715 = vld [vmem:[%s699 + $0x78] sm:$0xff]
      %716 = vmatprep.subr.mxu0 0.0
      %717 = vmatpush1.msra.mxu0 %v715
      %718 = vmatprep.subr.mxu0 0.0
      %719 = vmatpush1.msra.mxu0 %v714
      %720 = vmatprep.subr.mxu0 0.0
      %721 = vmatpush1.msra.mxu0 %v713
      %722 = vmatprep.subr.mxu0 0.0
      %723 = vmatpush1.msra.mxu0 %v712
      %724 = vmatprep.subr.mxu0 0.0
      %725 = vmatpush1.msra.mxu0 %v711
      %726 = vmatprep.subr.mxu0 0.0
      %727 = vmatpush1.msra.mxu0 %v710
      %728 = vmatprep.subr.mxu0 0.0
      %729 = vmatpush1.msra.mxu0 %v709
      %730 = vmatprep.subr.mxu0 0.0
      %731 = vmatpush1.msra.mxu0 %v708
      %732 = vmatprep.subr.mxu0 0.0
      %733 = vmatpush1.msra.mxu0 %v707
      %734 = vmatprep.subr.mxu0 0.0
      %735 = vmatpush1.msra.mxu0 %v706
      %736 = vmatprep.subr.mxu0 0.0
      %737 = vmatpush1.msra.mxu0 %v705
      %738 = vmatprep.subr.mxu0 0.0
      %739 = vmatpush1.msra.mxu0 %v704
      %740 = vmatprep.subr.mxu0 0.0
      %741 = vmatpush1.msra.mxu0 %v703
      %742 = vmatprep.subr.mxu0 0.0
      %743 = vmatpush1.msra.mxu0 %v702
      %744 = vmatprep.subr.mxu0 0.0
      %745 = vmatpush1.msra.mxu0 %v701
      %746 = vmatprep.subr.mxu0 0.0
      %747 = vmatpush1.msra.mxu0 %v700
      %748 = vmatprep.subr.mxu0 0.0
      %749 = vmatpush2.msra.mxu0 0.0
      %750 = vmatprep.subr.mxu0 0.0
      %751 = vmatpush2.msra.mxu0 0.0
      %752 = vmatprep.subr.mxu0 0.0
      %753 = vmatpush2.msra.mxu0 0.0
      %754 = vmatprep.subr.mxu0 0.0
      %755 = vmatpush2.msra.mxu0 0.0
      %756 = vmatprep.subr.mxu0 0.0
      %757 = vmatpush2.msra.mxu0 0.0
      %758 = vmatprep.subr.mxu0 0.0
      %759 = vmatpush2.msra.mxu0 0.0
      %760 = vmatprep.subr.mxu0 0.0
      %761 = vmatpush2.msra.mxu0 0.0
      %762 = vmatprep.subr.mxu0 0.0
      %763 = vmatpush2.msra.mxu0 0.0
      %764 = vmatprep.subr.mxu0 0.0
      %765 = vmatpush2.msra.mxu0 0.0
      %766 = vmatprep.subr.mxu0 0.0
      %767 = vmatpush2.msra.mxu0 0.0
      %768 = vmatprep.subr.mxu0 0.0
      %769 = vmatpush2.msra.mxu0 0.0
      %770 = vmatprep.subr.mxu0 0.0
      %771 = vmatpush2.msra.mxu0 0.0
      %772 = vmatprep.subr.mxu0 0.0
      %773 = vmatpush2.msra.mxu0 0.0
      %774 = vmatprep.subr.mxu0 0.0
      %775 = vmatpush2.msra.mxu0 0.0
      %776 = vmatprep.subr.mxu0 0.0
      %777 = vmatpush2.msra.mxu0 0.0
      %778 = vmatprep.subr.mxu0 0.0
      %779 = vmatpush2.msra.mxu0 0.0
      %780 = vmatprep.mubr.f32.mxu0 0.0
      %781 = vmatmul.mubr.f32.gmra.mxu0 %v667
      %v782 = vpop.f32.mrf.mxu0
      %v783 = vadd.f32 0.0, %v782
      %v784 = vpop.f32.mrf.mxu0
      %785 = vmatprep.mubr.f32.mxu0 0.0
      %786 = vmatmul.mubr.f32.gmra.mxu0 %v668
      %v787 = vpop.f32.mrf.mxu0
      %v788 = vadd.f32 0.0, %v787
      %v789 = vpop.f32.mrf.mxu0
      %790 = vdwg.mxu0
      %791 = vmatprep.subr.mxu0 0.0
      %792 = vmatpush1.msra.mxu0 %v698
      %793 = vmatprep.subr.mxu0 0.0
      %794 = vmatpush1.msra.mxu0 %v697
      %795 = vmatprep.subr.mxu0 0.0
      %796 = vmatpush1.msra.mxu0 %v696
      %797 = vmatprep.subr.mxu0 0.0
      %798 = vmatpush1.msra.mxu0 %v695
      %799 = vmatprep.subr.mxu0 0.0
      %800 = vmatpush1.msra.mxu0 %v694
      %801 = vmatprep.subr.mxu0 0.0
      %802 = vmatpush1.msra.mxu0 %v693
      %803 = vmatprep.subr.mxu0 0.0
      %804 = vmatpush1.msra.mxu0 %v692
      %805 = vmatprep.subr.mxu0 0.0
      %806 = vmatpush1.msra.mxu0 %v691
      %807 = vmatprep.subr.mxu0 0.0
      %808 = vmatpush1.msra.mxu0 %v690
      %809 = vmatprep.subr.mxu0 0.0
      %810 = vmatpush1.msra.mxu0 %v689
      %811 = vmatprep.subr.mxu0 0.0
      %812 = vmatpush1.msra.mxu0 %v688
      %813 = vmatprep.subr.mxu0 0.0
      %814 = vmatpush1.msra.mxu0 %v687
      %815 = vmatprep.subr.mxu0 0.0
      %816 = vmatpush1.msra.mxu0 %v686
      %817 = vmatprep.subr.mxu0 0.0
      %818 = vmatpush1.msra.mxu0 %v685
      %819 = vmatprep.subr.mxu0 0.0
      %820 = vmatpush1.msra.mxu0 %v684
      %821 = vmatprep.subr.mxu0 0.0
      %822 = vmatpush1.msra.mxu0 %v683
      %823 = vmatprep.subr.mxu0 0.0
      %824 = vmatpush2.msra.mxu0 0.0
      %825 = vmatprep.subr.mxu0 0.0
      %826 = vmatpush2.msra.mxu0 0.0
      %827 = vmatprep.subr.mxu0 0.0
      %828 = vmatpush2.msra.mxu0 0.0
      %829 = vmatprep.subr.mxu0 0.0
      %830 = vmatpush2.msra.mxu0 0.0
      %831 = vmatprep.subr.mxu0 0.0
      %832 = vmatpush2.msra.mxu0 0.0
      %833 = vmatprep.subr.mxu0 0.0
      %834 = vmatpush2.msra.mxu0 0.0
      %835 = vmatprep.subr.mxu0 0.0
      %836 = vmatpush2.msra.mxu0 0.0
      %837 = vmatprep.subr.mxu0 0.0
      %838 = vmatpush2.msra.mxu0 0.0
      %839 = vmatprep.subr.mxu0 0.0
      %840 = vmatpush2.msra.mxu0 0.0
      %841 = vmatprep.subr.mxu0 0.0
      %842 = vmatpush2.msra.mxu0 0.0
      %843 = vmatprep.subr.mxu0 0.0
      %844 = vmatpush2.msra.mxu0 0.0
      %845 = vmatprep.subr.mxu0 0.0
      %846 = vmatpush2.msra.mxu0 0.0
      %847 = vmatprep.subr.mxu0 0.0
      %848 = vmatpush2.msra.mxu0 0.0
      %849 = vmatprep.subr.mxu0 0.0
      %850 = vmatpush2.msra.mxu0 0.0
      %851 = vmatprep.subr.mxu0 0.0
      %852 = vmatpush2.msra.mxu0 0.0
      %853 = vmatprep.subr.mxu0 0.0
      %854 = vmatpush2.msra.mxu0 0.0
      %855 = vmatprep.mubr.f32.mxu0 0.0
      %856 = vmatmul.mubr.f32.gmra.mxu0 %v676
      %v857 = vpop.f32.mrf.mxu0
      %v858 = vadd.f32 %v783, %v857
      %v859 = vpop.f32.mrf.mxu0
      %860 = vmatprep.mubr.f32.mxu0 0.0
      %861 = vmatmul.mubr.f32.gmra.mxu0 %v673
      %v862 = vpop.f32.mrf.mxu0
      %v863 = vadd.f32 %v788, %v862
      %v864 = vpop.f32.mrf.mxu0
      %865 = vdwg.mxu0
      %s866 = scalar_lea.vmem %s2, 256
      %v867 = vld [vmem:[%s866] sm:$0xff]
      %v868 = vld [vmem:[%s866 + $0x8] sm:$0xff]
      %v869 = vld [vmem:[%s866 + $0x10] sm:$0xff]
      %v870 = vld [vmem:[%s866 + $0x18] sm:$0xff]
      %v871 = vld [vmem:[%s866 + $0x20] sm:$0xff]
      %v872 = vld [vmem:[%s866 + $0x28] sm:$0xff]
      %v873 = vld [vmem:[%s866 + $0x30] sm:$0xff]
      %v874 = vld [vmem:[%s866 + $0x38] sm:$0xff]
      %v875 = vld [vmem:[%s866 + $0x40] sm:$0xff]
      %v876 = vld [vmem:[%s866 + $0x48] sm:$0xff]
      %v877 = vld [vmem:[%s866 + $0x50] sm:$0xff]
      %v878 = vld [vmem:[%s866 + $0x58] sm:$0xff]
      %v879 = vld [vmem:[%s866 + $0x60] sm:$0xff]
      %v880 = vld [vmem:[%s866 + $0x68] sm:$0xff]
      %v881 = vld [vmem:[%s866 + $0x70] sm:$0xff]
      %v882 = vld [vmem:[%s866 + $0x78] sm:$0xff]
      %883 = vmatprep.subr.mxu0 0.0
      %884 = vmatpush1.msra.mxu0 %v882
      %885 = vmatprep.subr.mxu0 0.0
      %886 = vmatpush1.msra.mxu0 %v881
      %887 = vmatprep.subr.mxu0 0.0
      %888 = vmatpush1.msra.mxu0 %v880
      %889 = vmatprep.subr.mxu0 0.0
      %890 = vmatpush1.msra.mxu0 %v879
      %891 = vmatprep.subr.mxu0 0.0
      %892 = vmatpush1.msra.mxu0 %v878
      %893 = vmatprep.subr.mxu0 0.0
      %894 = vmatpush1.msra.mxu0 %v877
      %895 = vmatprep.subr.mxu0 0.0
      %896 = vmatpush1.msra.mxu0 %v876
      %897 = vmatprep.subr.mxu0 0.0
      %898 = vmatpush1.msra.mxu0 %v875
      %899 = vmatprep.subr.mxu0 0.0
      %900 = vmatpush1.msra.mxu0 %v874
      %901 = vmatprep.subr.mxu0 0.0
      %902 = vmatpush1.msra.mxu0 %v873
      %903 = vmatprep.subr.mxu0 0.0
      %904 = vmatpush1.msra.mxu0 %v872
      %905 = vmatprep.subr.mxu0 0.0
      %906 = vmatpush1.msra.mxu0 %v871
      %907 = vmatprep.subr.mxu0 0.0
      %908 = vmatpush1.msra.mxu0 %v870
      %909 = vmatprep.subr.mxu0 0.0
      %910 = vmatpush1.msra.mxu0 %v869
      %911 = vmatprep.subr.mxu0 0.0
      %912 = vmatpush1.msra.mxu0 %v868
      %913 = vmatprep.subr.mxu0 0.0
      %914 = vmatpush1.msra.mxu0 %v867
      %915 = vmatprep.subr.mxu0 0.0
      %916 = vmatpush2.msra.mxu0 0.0
      %917 = vmatprep.subr.mxu0 0.0
      %918 = vmatpush2.msra.mxu0 0.0
      %919 = vmatprep.subr.mxu0 0.0
      %920 = vmatpush2.msra.mxu0 0.0
      %921 = vmatprep.subr.mxu0 0.0
      %922 = vmatpush2.msra.mxu0 0.0
      %923 = vmatprep.subr.mxu0 0.0
      %924 = vmatpush2.msra.mxu0 0.0
      %925 = vmatprep.subr.mxu0 0.0
      %926 = vmatpush2.msra.mxu0 0.0
      %927 = vmatprep.subr.mxu0 0.0
      %928 = vmatpush2.msra.mxu0 0.0
      %929 = vmatprep.subr.mxu0 0.0
      %930 = vmatpush2.msra.mxu0 0.0
      %931 = vmatprep.subr.mxu0 0.0
      %932 = vmatpush2.msra.mxu0 0.0
      %933 = vmatprep.subr.mxu0 0.0
      %934 = vmatpush2.msra.mxu0 0.0
      %935 = vmatprep.subr.mxu0 0.0
      %936 = vmatpush2.msra.mxu0 0.0
      %937 = vmatprep.subr.mxu0 0.0
      %938 = vmatpush2.msra.mxu0 0.0
      %939 = vmatprep.subr.mxu0 0.0
      %940 = vmatpush2.msra.mxu0 0.0
      %941 = vmatprep.subr.mxu0 0.0
      %942 = vmatpush2.msra.mxu0 0.0
      %943 = vmatprep.subr.mxu0 0.0
      %944 = vmatpush2.msra.mxu0 0.0
      %945 = vmatprep.subr.mxu0 0.0
      %946 = vmatpush2.msra.mxu0 0.0
      %947 = vmatprep.mubr.f32.mxu0 0.0
      %948 = vmatmul.mubr.f32.gmra.mxu0 %v679
      %v949 = vpop.f32.mrf.mxu0
      %v950 = vadd.f32 0.0, %v949
      %v951 = vpop.f32.mrf.mxu0
      %952 = vmatprep.mubr.f32.mxu0 0.0
      %953 = vmatmul.mubr.f32.gmra.mxu0 %v682
      %v954 = vpop.f32.mrf.mxu0
      %v955 = vadd.f32 0.0, %v954
      %v956 = vpop.f32.mrf.mxu0
      %957 = vdwg.mxu0
      %v958 = vadd.f32 %v858, %v950
      %v959 = vadd.f32 %v863, %v955
      %v960 = vadd.f32 %v958, %v959
      %v961 = vrot.slane %v960, 4
      %v962 = vadd.f32 %v960, %v961
      %v963 = vrot.slane %v962, 2
      %v964 = vadd.f32 %v962, %v963
      %v965 = vrot.slane %v964, 1
      %v966 = vadd.f32 %v964, %v965
      %967 = vmatprep.subr.mxu0 0.0
      %968 = vmatpush1.msra.mxu0 %v504
      %969 = vmatprep.subr.mxu0 0.0
      %970 = vmatpush1.msra.mxu0 %v503
      %971 = vmatprep.subr.mxu0 0.0
      %972 = vmatpush1.msra.mxu0 %v502
      %973 = vmatprep.subr.mxu0 0.0
      %974 = vmatpush1.msra.mxu0 %v501
      %975 = vmatprep.subr.mxu0 0.0
      %976 = vmatpush1.msra.mxu0 %v500
      %977 = vmatprep.subr.mxu0 0.0
      %978 = vmatpush1.msra.mxu0 %v499
      %979 = vmatprep.subr.mxu0 0.0
      %980 = vmatpush1.msra.mxu0 %v498
      %981 = vmatprep.subr.mxu0 0.0
      %982 = vmatpush1.msra.mxu0 %v497
      %983 = vmatprep.subr.mxu0 0.0
      %984 = vmatpush1.msra.mxu0 %v496
      %985 = vmatprep.subr.mxu0 0.0
      %986 = vmatpush1.msra.mxu0 %v495
      %987 = vmatprep.subr.mxu0 0.0
      %988 = vmatpush1.msra.mxu0 %v494
      %989 = vmatprep.subr.mxu0 0.0
      %990 = vmatpush1.msra.mxu0 %v493
      %991 = vmatprep.subr.mxu0 0.0
      %992 = vmatpush1.msra.mxu0 %v492
      %993 = vmatprep.subr.mxu0 0.0
      %994 = vmatpush1.msra.mxu0 %v491
      %995 = vmatprep.subr.mxu0 0.0
      %996 = vmatpush1.msra.mxu0 %v490
      %997 = vmatprep.subr.mxu0 0.0
      %998 = vmatpush1.msra.mxu0 %v489
      %999 = vmatprep.subr.mxu0 0.0
      %1000 = vmatpush2.msra.mxu0 0.0
      %1001 = vmatprep.subr.mxu0 0.0
      %1002 = vmatpush2.msra.mxu0 0.0
      %1003 = vmatprep.subr.mxu0 0.0
      %1004 = vmatpush2.msra.mxu0 0.0
      %1005 = vmatprep.subr.mxu0 0.0
      %1006 = vmatpush2.msra.mxu0 0.0
      %1007 = vmatprep.subr.mxu0 0.0
      %1008 = vmatpush2.msra.mxu0 0.0
      %1009 = vmatprep.subr.mxu0 0.0
      %1010 = vmatpush2.msra.mxu0 0.0
      %1011 = vmatprep.subr.mxu0 0.0
      %1012 = vmatpush2.msra.mxu0 0.0
      %1013 = vmatprep.subr.mxu0 0.0
      %1014 = vmatpush2.msra.mxu0 0.0
      %1015 = vmatprep.subr.mxu0 0.0
      %1016 = vmatpush2.msra.mxu0 0.0
      %1017 = vmatprep.subr.mxu0 0.0
      %1018 = vmatpush2.msra.mxu0 0.0
      %1019 = vmatprep.subr.mxu0 0.0
      %1020 = vmatpush2.msra.mxu0 0.0
      %1021 = vmatprep.subr.mxu0 0.0
      %1022 = vmatpush2.msra.mxu0 0.0
      %1023 = vmatprep.subr.mxu0 0.0
      %1024 = vmatpush2.msra.mxu0 0.0
      %1025 = vmatprep.subr.mxu0 0.0
      %1026 = vmatpush2.msra.mxu0 0.0
      %1027 = vmatprep.subr.mxu0 0.0
      %1028 = vmatpush2.msra.mxu0 0.0
      %1029 = vmatprep.subr.mxu0 0.0
      %1030 = vmatpush2.msra.mxu0 0.0
      %1031 = vmatprep.mubr.f32.mxu0 0.0
      %1032 = vmatmul.mubr.f32.gmra.mxu0 %v966
      %v1033 = vpop.f32.mrf.mxu0
      %v1034 = vadd.f32 0.0, %v1033
      %v1035 = vpop.f32.mrf.mxu0
      %1036 = vdwg.mxu0
      %v1037 = vlaneseq
      %v1038 = vshrl.u32 %v1037, 7
      %v1039 = vsub.s32 0, %v1038
      %v1040 = vrot.slane %v1034, %v1039
      %v1041 = vsub.f32 %v958, %v1040
      %v1042 = vsub.f32 %v959, %v1040
      %v1043 = vmul.f32 %v1041, %v1041
      %v1044 = vmul.f32 %v1042, %v1042
      %v1045 = vadd.f32 %v1043, %v1044
      %v1046 = vrot.slane %v1045, 4
      %v1047 = vadd.f32 %v1045, %v1046
      %v1048 = vrot.slane %v1047, 2
      %v1049 = vadd.f32 %v1047, %v1048
      %v1050 = vrot.slane %v1049, 1
      %v1051 = vadd.f32 %v1049, %v1050
      %1052 = vmatprep.subr.mxu0 0.0
      %1053 = vmatpush1.msra.mxu0 %v504
      %1054 = vmatprep.subr.mxu0 0.0
      %1055 = vmatpush1.msra.mxu0 %v503
      %1056 = vmatprep.subr.mxu0 0.0
      %1057 = vmatpush1.msra.mxu0 %v502
      %1058 = vmatprep.subr.mxu0 0.0
      %1059 = vmatpush1.msra.mxu0 %v501
      %1060 = vmatprep.subr.mxu0 0.0
      %1061 = vmatpush1.msra.mxu0 %v500
      %1062 = vmatprep.subr.mxu0 0.0
      %1063 = vmatpush1.msra.mxu0 %v499
      %1064 = vmatprep.subr.mxu0 0.0
      %1065 = vmatpush1.msra.mxu0 %v498
      %1066 = vmatprep.subr.mxu0 0.0
      %1067 = vmatpush1.msra.mxu0 %v497
      %1068 = vmatprep.subr.mxu0 0.0
      %1069 = vmatpush1.msra.mxu0 %v496
      %1070 = vmatprep.subr.mxu0 0.0
      %1071 = vmatpush1.msra.mxu0 %v495
      %1072 = vmatprep.subr.mxu0 0.0
      %1073 = vmatpush1.msra.mxu0 %v494
      %1074 = vmatprep.subr.mxu0 0.0
      %1075 = vmatpush1.msra.mxu0 %v493
      %1076 = vmatprep.subr.mxu0 0.0
      %1077 = vmatpush1.msra.mxu0 %v492
      %1078 = vmatprep.subr.mxu0 0.0
      %1079 = vmatpush1.msra.mxu0 %v491
      %1080 = vmatprep.subr.mxu0 0.0
      %1081 = vmatpush1.msra.mxu0 %v490
      %1082 = vmatprep.subr.mxu0 0.0
      %1083 = vmatpush1.msra.mxu0 %v489
      %1084 = vmatprep.subr.mxu0 0.0
      %1085 = vmatpush2.msra.mxu0 0.0
      %1086 = vmatprep.subr.mxu0 0.0
      %1087 = vmatpush2.msra.mxu0 0.0
      %1088 = vmatprep.subr.mxu0 0.0
      %1089 = vmatpush2.msra.mxu0 0.0
      %1090 = vmatprep.subr.mxu0 0.0
      %1091 = vmatpush2.msra.mxu0 0.0
      %1092 = vmatprep.subr.mxu0 0.0
      %1093 = vmatpush2.msra.mxu0 0.0
      %1094 = vmatprep.subr.mxu0 0.0
      %1095 = vmatpush2.msra.mxu0 0.0
      %1096 = vmatprep.subr.mxu0 0.0
      %1097 = vmatpush2.msra.mxu0 0.0
      %1098 = vmatprep.subr.mxu0 0.0
      %1099 = vmatpush2.msra.mxu0 0.0
      %1100 = vmatprep.subr.mxu0 0.0
      %1101 = vmatpush2.msra.mxu0 0.0
      %1102 = vmatprep.subr.mxu0 0.0
      %1103 = vmatpush2.msra.mxu0 0.0
      %1104 = vmatprep.subr.mxu0 0.0
      %1105 = vmatpush2.msra.mxu0 0.0
      %1106 = vmatprep.subr.mxu0 0.0
      %1107 = vmatpush2.msra.mxu0 0.0
      %1108 = vmatprep.subr.mxu0 0.0
      %1109 = vmatpush2.msra.mxu0 0.0
      %1110 = vmatprep.subr.mxu0 0.0
      %1111 = vmatpush2.msra.mxu0 0.0
      %1112 = vmatprep.subr.mxu0 0.0
      %1113 = vmatpush2.msra.mxu0 0.0
      %1114 = vmatprep.subr.mxu0 0.0
      %1115 = vmatpush2.msra.mxu0 0.0
      %1116 = vmatprep.mubr.f32.mxu0 0.0
      %1117 = vmatmul.mubr.f32.gmra.mxu0 %v1051
      %v1118 = vpop.f32.mrf.mxu0
      %v1119 = vadd.f32 1e-05, %v1118
      %v1120 = vpop.f32.mrf.mxu0
      %1121 = vdwg.mxu0
      %v1122 = vrsqrt.pop %v1119
      %v1123 = vlaneseq
      %v1124 = vshrl.u32 %v1123, 7
      %v1125 = vsub.s32 0, %v1124
      %v1126 = vrot.slane %v1122, %v1125
      %v1127 = vmul.f32 %v1041, %v1126
      %v1128 = vmul.f32 %v1042, %v1126
      %v1129 = vmax.f32 %v1127, 0.0
      %v1130 = vmax.f32 %v1128, 0.0
      %1131 = vst [vmem:[%s197] sm:$0xff] %v1129
      %1132 = vst [vmem:[%s197 + $0x8] sm:$0xff] %v1130
      %p1133 = scmp.lt.s32.totalorder %s15, 1
      %s1134 = scalar_select %p1133, %s15, 1
      %s1135 = smul.addr %s1134, 2
      %s1136 = smul.addr %s1135, 8
      %s1137 = scalar_lea.vmem %s4, %s1136
      // Predicated region
      $region37: #{double_conv.1} parent=35 // pred_check
        %p1138 = pneg %p122
      $region38: #{double_conv.1} parent=35 // pred_check_branch
        %1140 = sbr.rel (%p1138) target = $region40
      $region39: #{double_conv.1} parent=35 // pred_region
        _
      $region40: #{double_conv.1} parent=35 // pred_fallthru
        _
    $region36: #{double_conv.1} parent=5 // pred_fallthru
      _
    %p1141 = scmp.le.s32.totalorder 2, %s10
    // Predicated region
    $region41: #{double_conv.1} parent=5 // pred_check
      %p1142 = pneg %p1141
    $region42: #{double_conv.1} parent=5 // pred_check_branch
      %1144 = sbr.rel (%p1142) target = $region44
    $region43: #{double_conv.1} parent=5 // pred_region
      %s1145 = ssub.s32 %s10, 2
      // Predicated region
      $region45: #{double_conv.1} parent=43 // pred_check
        %p1146 = pneg %p128
      $region46: #{double_conv.1} parent=43 // pred_check_branch
        %1148 = sbr.rel (%p1146) target = $region48
      $region47: #{double_conv.1} parent=43 // pred_region
        %p1149 = scmp.lt.s32.totalorder %s16, 1
        %s1150 = scalar_select %p1149, %s16, 1
        %s1151 = smul.addr %s1150, 2
        %s1152 = smul.addr %s1151, 8
        %s1153 = scalar_lea.vmem %s4, %s1152
      $region48: #{double_conv.1} parent=43 // pred_fallthru
        _
    $region44: #{double_conv.1} parent=5 // pred_fallthru
      _
  $region6: #{double_conv.1} parent=0 // loop_footer
    %s14 = sadd.s32 1, %s10
  $region7: #{double_conv.1} parent=0 // loop_footer_branch
    %9 = sbr.rel target = $region3
  $region8: #{double_conv.1} parent=0 // loop_exit
    _

</llo_original>
